<compile_context>
chip_gen: v5e
topology: v5e:2x2
jax: 0.10.0
libtpu: 0.0.40
codegen_flags: <defaults>
</compile_context>

<pallas_src>
import jax
import jax.numpy as jnp
from jax.experimental import pallas as pl
from jax.experimental.pallas import tpu as pltpu

_SUBLANE = 8
_LANE = 128


# --------------------------------------------------------------------------
# Primary path: DMA-free aliased no-op kernel.
# --------------------------------------------------------------------------
def _touch_kernel(x_ref, o_ref):
    # Output aliases the input HBM buffer; the data is already correct.
    # touch() just gives the kernel an explicit dependency on the output ref
    # so nothing is DCE'd -- no HBM<->VMEM DMA is emitted.
    del x_ref
    pltpu.touch(o_ref)


def identity_forward(x):
    """Identity: out = x.

    Preferred path -- pair with jax.jit(identity_forward, donate_argnums=0)
    so the aliased output reuses x's HBM buffer and the kernel moves no data.
    Without donation the result is still correct (XLA inserts one defensive
    copy); use identity_copy() if you explicitly want the tuned copy kernel.
    """
    if x.size == 0:
        return x
    return pl.pallas_call(
        _touch_kernel,
        out_shape=jax.ShapeDtypeStruct(x.shape, x.dtype),
        in_specs=[pl.BlockSpec(memory_space=pl.ANY)],
        out_specs=pl.BlockSpec(memory_space=pl.ANY),
        input_output_aliases={0: 0},
        cost_estimate=pl.CostEstimate(flops=0, transcendentals=0, bytes_accessed=0),
    )(x)


# --------------------------------------------------------------------------
# Fallback path: real lane-dense tiled copy (no donation available).
# --------------------------------------------------------------------------
def _copy_kernel(x_ref, o_ref):
    o_ref[...] = x_ref[...]


def _vmem_cap_bytes():
    """~75% of physical VMEM (generation-aware), leaving compiler headroom."""
    phys = 64 * 1024 * 1024  # most constrained generation (v7x per-TC)
    try:
        info = pltpu.get_tpu_info()
        phys = int(getattr(info, "vmem_capacity_bytes", phys))
    except Exception:
        pass
    return (phys // 4) * 3


def _lane_dense_view(n):
    """Factor n as (rows, cols) with cols a multiple of 128 (lane-dense)."""
    for c in (4096, 2048, 1024, 512, 256, 128):
        if n % c == 0 and n // c >= _SUBLANE:
            return n // c, c
    for c in (4096, 2048, 1024, 512, 256, 128):
        if n % c == 0:
            return n // c, c
    return None


def identity_copy(x):
    """Identity implemented as a tuned HBM->HBM copy kernel (1R + 1W)."""
    if x.size == 0:
        return x

    orig_shape = x.shape
    n = x.size
    itemsize = jnp.dtype(x.dtype).itemsize

    cap = _vmem_cap_bytes()
    # 4 double-buffers (2 in + 2 out) + headroom must fit under `cap`.
    block_target = max(1 << 20, min(16 << 20, (cap - (2 << 20)) // 4))

    rc = _lane_dense_view(n)
    if rc is not None:
        # Lane-dense 2-D view: free metadata reshape for contiguous arrays.
        r, c = rc
        work = x.reshape(r, c)
        row_bytes = c * itemsize
        tile_r = max(_SUBLANE, (block_target // row_bytes) // _SUBLANE * _SUBLANE)
        # Keep >= ~4 grid steps when possible so "parallel" can use both v7x TCs.
        steps_cap = max(_SUBLANE, pl.cdiv(pl.cdiv(r, 4), _SUBLANE) * _SUBLANE)
        tile_r = min(tile_r, steps_cap)
        if tile_r >= r:
            tile_r = r  # single full-extent block
        grid = (pl.cdiv(r, tile_r),)
        block_shape = (tile_r, c)
        index_map = lambda i: (i, 0)
        block_bytes = pl.cdiv(tile_r, _SUBLANE) * _SUBLANE * c * itemsize
    else:
        # Size not a multiple of 128: keep full-extent trailing dims (so the
        # (8,128) rule is satisfied by "equals full dim") and tile the leading
        # dim with a cdiv grid, sizing tiles from padded VMEM bytes.
        work = x if x.ndim >= 2 else x.reshape(1, n)
        shp = work.shape
        nd = work.ndim
        pad_last = pl.cdiv(shp[-1], _LANE) * _LANE
        pad_sub = pl.cdiv(shp[-2], _SUBLANE) * _SUBLANE if nd >= 3 else 1
        mid = 1
        for d in shp[1:-2]:
            mid *= d
        slice_bytes = mid * pad_sub * pad_last * 4  # conservative 32-bit words
        tile_b = max(1, block_target // slice_bytes)
        if nd == 2:
            # Leading dim is the block's sublane dim: multiple of 8 or full.
            if tile_b >= shp[0] or shp[0] <= _SUBLANE:
                tile_b = shp[0]
            else:
                tile_b = max(_SUBLANE, (tile_b // _SUBLANE) * _SUBLANE)
        tile_b = min(tile_b, shp[0])
        grid = (pl.cdiv(shp[0], tile_b),)
        block_shape = (tile_b,) + shp[1:]
        index_map = lambda i: (i,) + (0,) * (nd - 1)
        block_bytes = tile_b * slice_bytes

    vmem_limit = int(max(16 << 20, min(cap, 4 * block_bytes + (2 << 20))))
    total_bytes = n * itemsize

    out = pl.pallas_call(
        _copy_kernel,
        out_shape=jax.ShapeDtypeStruct(work.shape, work.dtype),
        grid_spec=pltpu.PrefetchScalarGridSpec(
            num_scalar_prefetch=0,
            grid=grid,
            in_specs=[pl.BlockSpec(block_shape, index_map)],
            out_specs=pl.BlockSpec(block_shape, index_map),
        ),
        cost_estimate=pl.CostEstimate(
            flops=0, transcendentals=0, bytes_accessed=2 * total_bytes
        ),
        compiler_params=pltpu.CompilerParams(
            dimension_semantics=("parallel",),
            vmem_limit_bytes=vmem_limit,
        ),
    )(work)

    return out.reshape(orig_shape) if out.shape != orig_shape else out


if __name__ == "__main__":
    key = jax.random.PRNGKey(0)
    # Small NCHW-like input consistent with a generic forward(x).
    x = jax.random.normal(key, (2, 4, 16, 16), dtype=jnp.float32)

    # Host copy for verification (x is later donated to the no-op path).
    x_host = jax.device_get(x)
    x_ref = jnp.asarray(x_host)

    # 1) Real-copy path (used when the caller cannot donate its buffer).
    y_copy = jax.block_until_ready(jax.jit(identity_copy)(x))
    assert y_copy.shape == tuple(x_host.shape) and y_copy.dtype == x_host.dtype
    assert bool(jnp.array_equal(y_copy, x_ref))

    # 2) Preferred DMA-free path: aliased no-op kernel + donated input.
    try:
        noop_fn = jax.jit(identity_forward, donate_argnums=0)
        y = jax.block_until_ready(noop_fn(x))
    except Exception:
        # Fall back to the tuned copy kernel if the DMA-free path is
        # unavailable on this backend (x may have been donated; rebuild it).
        y = jax.block_until_ready(jax.jit(identity_copy)(jnp.asarray(x_host)))

    assert y.shape == tuple(x_host.shape) and y.dtype == x_host.dtype
    assert bool(jnp.array_equal(y, x_ref))
    print("KERNEL_OK")
</pallas_src>

<mosaic_0001>
module attributes {stable_mosaic.version = 11 : i64} {
  func.func @_copy_kernel(%arg0: i32, %arg1: memref<8x256xf32, #tpu.memory_space<vmem>>, %arg2: memref<8x256xf32, #tpu.memory_space<vmem>>) attributes {dimension_semantics = [#tpu.dimension_semantics<parallel>], iteration_bounds = array<i64: 1>, scalar_prefetch = 0 : i64, scratch_operands = 0 : i64, tpu.core_type = #tpu.core_type<tc>, window_params = [{transform_indices = @transform_0, window_bounds = array<i64: 8, 256>}, {transform_indices = @transform_1, window_bounds = array<i64: 8, 256>}]} {
    %c0 = arith.constant 0 : index
    %c0_0 = arith.constant 0 : index
    %0 = vector.load %arg1[%c0, %c0_0] : memref<8x256xf32, #tpu.memory_space<vmem>>, vector<8x256xf32>
    %c0_1 = arith.constant 0 : index
    %c0_2 = arith.constant 0 : index
    %1 = vector.load %arg2[%c0_1, %c0_2] : memref<8x256xf32, #tpu.memory_space<vmem>>, vector<8x256xf32>
    tpu.vector_store %arg2[%c0_1, %c0_2], %0 {strides = array<i32>} : memref<8x256xf32, #tpu.memory_space<vmem>>, vector<8x256xf32>,
    return
  }
  func.func @transform_0(%arg0: i32) -> (i32, i32) {
    %c0_i32 = arith.constant 0 : i32
    %c0_i32_0 = arith.constant 0 : i32
    return %arg0, %c0_i32 : i32, i32
  }
  func.func @transform_1(%arg0: i32) -> (i32, i32) {
    %c0_i32 = arith.constant 0 : i32
    %c0_i32_0 = arith.constant 0 : i32
    return %arg0, %c0_i32 : i32, i32
  }
}

</mosaic_0001>

<llo_original>
// kernel: identity_copy.1
$region0: #{identity_copy.1}
  #allocation0 [shape = 'u32[]', space=smem, size = 0x4, offset = 0x4, fixed_abs, tag = 'smem constant byte address 0x4 - core index']
  #allocation1 [shape = 'u32[72,128]{1,0:T(1,128)}', space=vmem, size = 0x9000, scoped, tag = 'internal scratch']
  %s0 = inlined_call_operand.vmem [shape: f32[8,256], index: 0, kind: input, shape index: {}]
  %s1 = inlined_call_operand.vmem [shape: f32[8,256], index: 1, kind: output, shape index: {}]
  %s2 = sld [smem:[#allocation0]]
  $region14: #{identity_copy.1} parent=0
    _
  %s4 = ssub.s32 1, %s2
  %s5 = scalar_select 0, %s4, %s2
  // Predicated region
  $region2: #{identity_copy.1} parent=0 // pred_check
    _
  $region3: #{identity_copy.1} parent=0 // pred_check_branch
    %7 = sbr.rel (0) target = $region5
  $region4: #{identity_copy.1} parent=0 // pred_region
    _
  $region5: #{identity_copy.1} parent=0 // pred_fallthru
    _
  %v8 = vld [vmem:[%s0] sm:$0xff]
  %v9 = vld [vmem:[%s0 + $0x8] sm:$0xff]
  %10 = vst [vmem:[%s1] sm:$0xff] %v8
  %11 = vst [vmem:[%s1 + $0x8] sm:$0xff] %v9
  // Predicated region
  $region6: #{identity_copy.1} parent=0 // pred_check
    _
  $region7: #{identity_copy.1} parent=0 // pred_check_branch
    %13 = sbr.rel (0) target = $region9
  $region8: #{identity_copy.1} parent=0 // pred_region
    _
  $region9: #{identity_copy.1} parent=0 // pred_fallthru
    _
  // Predicated region
  $region10: #{identity_copy.1} parent=0 // pred_check
    _
  $region11: #{identity_copy.1} parent=0 // pred_check_branch
    %15 = sbr.rel (0) target = $region13
  $region12: #{identity_copy.1} parent=0 // pred_region
    _
  $region13: #{identity_copy.1} parent=0 // pred_fallthru
    _

</llo_original>
